<compile_context>
chip_gen: v7x
topology: tpu7x:2x2x1
jax: 0.10.0
libtpu: 0.0.40
codegen_flags: <defaults>
</compile_context>

<pallas_src>
import functools

import jax
import jax.numpy as jnp
from jax.experimental import pallas as pl
from jax.experimental.pallas import tpu as pltpu

_LANE = 128      # last-dim alignment (vreg lanes)
_SUBLANE = 8     # second-to-last-dim alignment (vreg sublanes)


def _round_up(x, m):
    return -(-x // m) * m


def _pick_tile(dim, preferred, align):
    """Largest tile <= preferred that is a multiple of `align` and divides
    `dim`; falls back to the full dim (always a legal Pallas block)."""
    if dim <= preferred:
        return dim
    t = (preferred // align) * align
    while t >= align:
        if dim % t == 0:
            return t
        t -= align
    return dim


# ---------------------------------------------------------------------------
# Single-step cell: tiled matmul + fused bias/add/ReLU epilogue
# ---------------------------------------------------------------------------

def _rnn_cell_kernel(x_ref, h_ref, wt_ref, b_ref, out_ref, acc_ref):
    k = pl.program_id(2)

    @pl.when(k == 0)
    def _():
        acc_ref[...] = jnp.zeros_like(acc_ref)

    # [tm, tk] @ [tk, tn] on the MXU, f32 accumulation. W was pre-transposed
    # in the wrapper, so no in-kernel relayout/XLU transpose is needed.
    acc_ref[...] += jnp.dot(h_ref[...], wt_ref[...],
                            preferred_element_type=jnp.float32)

    @pl.when(k == pl.num_programs(2) - 1)
    def _():
        combined = acc_ref[...] + b_ref[...] + x_ref[...]   # f32 epilogue
        out_ref[...] = jnp.maximum(combined, 0.0).astype(out_ref.dtype)


def simple_rnn_cell(inp, hidden, w, b, *,
                    compute_dtype=jnp.bfloat16,
                    tm=256, tn=256, tk=512):
    """One SimpleRNNCell1 step: relu(hidden @ w.T + b + inp).

    inp, hidden: [B, H] f32;  w: [H, H] (nn.Linear (out,in));  b: [H].
    """
    B, H = inp.shape
    out_dtype = inp.dtype
    Hp = _round_up(H, _LANE)

    # Lane-dense zero padding (exact: padded K rows of W.T are zero, padded
    # output columns are relu(0) = 0 and get sliced off below).
    if Hp != H:
        p = Hp - H
        inp = jnp.pad(inp, ((0, 0), (0, p)))
        hidden = jnp.pad(hidden, ((0, 0), (0, p)))
        w = jnp.pad(w, ((0, p), (0, p)))
        b = jnp.pad(b, ((0, p),))

    # Pre-transpose W once outside the kernel (amortized across timesteps).
    wt = w.T.astype(compute_dtype)              # [K(in), N(out)]
    h_c = hidden.astype(compute_dtype)          # bf16 MXU operand
    x_f = inp.astype(jnp.float32)               # f32 epilogue operands
    b2d = b.reshape(1, Hp).astype(jnp.float32)

    tm_ = _pick_tile(B, tm, _SUBLANE)
    tn_ = _pick_tile(Hp, tn, _LANE)
    tk_ = _pick_tile(Hp, tk, _LANE)
    grid = (B // tm_, Hp // tn_, Hp // tk_)

    out = pl.pallas_call(
        _rnn_cell_kernel,
        out_shape=jax.ShapeDtypeStruct((B, Hp), out_dtype),
        grid=grid,
        in_specs=[
            pl.BlockSpec((tm_, tn_), lambda i, j, k: (i, j)),   # input x
            pl.BlockSpec((tm_, tk_), lambda i, j, k: (i, k)),   # hidden
            # On v7x, consider pipeline_mode=pl.Buffered(3) here once the grid
            # over k is long enough for deeper W-tile pipelining to pay off.
            pl.BlockSpec((tk_, tn_), lambda i, j, k: (k, j)),   # W.T tile
            pl.BlockSpec((1, tn_),   lambda i, j, k: (0, j)),   # bias (per N tile)
        ],
        out_specs=pl.BlockSpec((tm_, tn_), lambda i, j, k: (i, j)),
        scratch_shapes=[pltpu.VMEM((tm_, tn_), jnp.float32)],
        compiler_params=pltpu.CompilerParams(
            dimension_semantics=("parallel", "parallel", "arbitrary"),
            vmem_limit_bytes=32 * 1024 * 1024,
        ),
    )(x_f, h_c, wt, b2d)

    return out[:, :H] if Hp != H else out


# ---------------------------------------------------------------------------
# Fused time loop: weight-stationary, hidden state carried in VMEM scratch
# ---------------------------------------------------------------------------

def _rnn_scan_kernel(x_ref, h0_ref, wt_ref, b_ref, out_ref, h_scratch, *,
                     mm_dtype):
    @pl.when(pl.program_id(0) == 0)
    def _():
        h_scratch[...] = h0_ref[...]

    hm = jnp.dot(h_scratch[...].astype(mm_dtype), wt_ref[...],
                 preferred_element_type=jnp.float32)
    new_h = jnp.maximum(hm + b_ref[...] + x_ref[0], 0.0)   # f32 epilogue
    h_scratch[...] = new_h
    out_ref[0] = new_h.astype(out_ref.dtype)


def simple_rnn_scan(xs, h0, w, b, *, compute_dtype=jnp.bfloat16):
    """Run SimpleRNNCell1 over a whole sequence in ONE pallas_call.

    xs: [T, B, H];  h0: [B, H];  w: [H, H];  b: [H]  ->  all hidden states [T, B, H].
    W and bias stay resident in VMEM (constant block index over t); only x_t
    streams and the hidden state is carried in a VMEM scratch.
    """
    T, B, H = xs.shape
    out_dtype = xs.dtype
    Hp = _round_up(H, _LANE)
    if Hp != H:
        p = Hp - H
        xs = jnp.pad(xs, ((0, 0), (0, 0), (0, p)))
        h0 = jnp.pad(h0, ((0, 0), (0, p)))
        w = jnp.pad(w, ((0, p), (0, p)))
        b = jnp.pad(b, ((0, p),))

    wt = w.T.astype(compute_dtype)              # resident weight, [K, N]
    b2d = b.reshape(1, Hp).astype(jnp.float32)
    xs_f = xs.astype(jnp.float32)
    h0_f = h0.astype(jnp.float32)

    # TODO(synk): for very large H (bf16 W > ~half of v7x's 64 MiB VMEM), tile W
    # along N with an inner N loop instead of keeping the full W resident.
    ys = pl.pallas_call(
        functools.partial(_rnn_scan_kernel, mm_dtype=compute_dtype),
        out_shape=jax.ShapeDtypeStruct((T, B, Hp), out_dtype),
        grid=(T,),
        in_specs=[
            pl.BlockSpec((1, B, Hp), lambda t: (t, 0, 0)),   # x_t   (streamed)
            pl.BlockSpec((B, Hp),    lambda t: (0, 0)),      # h0    (resident)
            pl.BlockSpec((Hp, Hp),   lambda t: (0, 0)),      # W.T   (resident)
            pl.BlockSpec((1, Hp),    lambda t: (0, 0)),      # bias  (resident)
        ],
        out_specs=pl.BlockSpec((1, B, Hp), lambda t: (t, 0, 0)),
        scratch_shapes=[pltpu.VMEM((B, Hp), jnp.float32)],
        compiler_params=pltpu.CompilerParams(
            dimension_semantics=("arbitrary",),   # time is sequential (carry)
            vmem_limit_bytes=32 * 1024 * 1024,
        ),
    )(xs_f, h0_f, wt, b2d)

    return ys[:, :, :H] if Hp != H else ys


# ---------------------------------------------------------------------------
# Pure-JAX references
# ---------------------------------------------------------------------------

def simple_rnn_cell_ref(inp, hidden, w, b):
    hm = jnp.dot(hidden, w.T, precision=jax.lax.Precision.HIGHEST)
    return jnp.maximum(hm + b + inp, 0.0)


def simple_rnn_scan_ref(xs, h0, w, b, compute_dtype=jnp.float32):
    wt = w.T.astype(compute_dtype)

    def step(h, x):
        hm = jnp.dot(h.astype(compute_dtype), wt,
                     preferred_element_type=jnp.float32,
                     precision=jax.lax.Precision.HIGHEST)
        h_new = jnp.maximum(hm + b + x, 0.0)
        return h_new, h_new

    _, ys = jax.lax.scan(step, h0, xs)
    return ys


if __name__ == "__main__":
    batch, hidden_size, seq_len = 2, 32, 8

    key = jax.random.PRNGKey(0)
    k_w, k_b, k_x, k_h, k_xs = jax.random.split(key, 5)

    bound = 1.0 / (hidden_size ** 0.5)
    w = jax.random.uniform(k_w, (hidden_size, hidden_size),
                           minval=-bound, maxval=bound, dtype=jnp.float32)
    b = jax.random.uniform(k_b, (hidden_size,),
                           minval=-bound, maxval=bound, dtype=jnp.float32)
    x = jax.random.normal(k_x, (batch, hidden_size), dtype=jnp.float32)
    h = jax.random.normal(k_h, (batch, hidden_size), dtype=jnp.float32)
    xs = jax.random.normal(k_xs, (seq_len, batch, hidden_size), dtype=jnp.float32)
    h0 = jnp.zeros((batch, hidden_size), dtype=jnp.float32)  # init_hidden

    # --- single step, f32 MXU path ------------------------------------------
    ref = simple_rnn_cell_ref(x, h, w, b)
    out_f32 = jax.block_until_ready(
        simple_rnn_cell(x, h, w, b, compute_dtype=jnp.float32))
    assert out_f32.shape == (batch, hidden_size)
    assert jnp.allclose(out_f32, ref, atol=5e-4, rtol=5e-4), "cell f32 mismatch"

    # --- single step, bf16 MXU operands / f32 accumulation ------------------
    out_bf16 = jax.block_until_ready(simple_rnn_cell(x, h, w, b))
    assert out_bf16.shape == (batch, hidden_size)
    assert jnp.allclose(out_bf16, ref, atol=5e-2, rtol=5e-2), "cell bf16 mismatch"

    # --- fused time loop (weight-stationary), f32 and bf16 -------------------
    ys_f32 = jax.block_until_ready(
        simple_rnn_scan(xs, h0, w, b, compute_dtype=jnp.float32))
    ys_ref_f32 = simple_rnn_scan_ref(xs, h0, w, b, compute_dtype=jnp.float32)
    assert ys_f32.shape == (seq_len, batch, hidden_size)
    assert jnp.allclose(ys_f32, ys_ref_f32, atol=5e-4, rtol=5e-4), \
        "scan f32 mismatch"

    ys_bf16 = jax.block_until_ready(simple_rnn_scan(xs, h0, w, b))
    ys_ref_bf16 = simple_rnn_scan_ref(xs, h0, w, b, compute_dtype=jnp.bfloat16)
    assert jnp.allclose(ys_bf16, ys_ref_bf16, atol=2e-3, rtol=2e-3), \
        "scan bf16 mismatch"

    print("KERNEL_OK")
</pallas_src>

<mosaic_0001>
module attributes {stable_mosaic.version = 11 : i64} {
  func.func @_rnn_cell_kernel(%arg0: i32, %arg1: i32, %arg2: i32, %arg3: memref<2x128xf32, #tpu.memory_space<vmem>>, %arg4: memref<2x128xf32, #tpu.memory_space<vmem>>, %arg5: memref<128x128xf32, #tpu.memory_space<vmem>>, %arg6: memref<1x128xf32, #tpu.memory_space<vmem>>, %arg7: memref<2x128xf32, #tpu.memory_space<vmem>>, %arg8: memref<2x128xf32, #tpu.memory_space<vmem>>) attributes {dimension_semantics = [#tpu.dimension_semantics<parallel>, #tpu.dimension_semantics<parallel>, #tpu.dimension_semantics<arbitrary>], iteration_bounds = array<i64: 1, 1, 1>, scalar_prefetch = 0 : i64, scratch_operands = 1 : i64, tpu.core_type = #tpu.core_type<tc>, window_params = [{transform_indices = @transform_0, window_bounds = array<i64: 2, 128>}, {transform_indices = @transform_1, window_bounds = array<i64: 2, 128>}, {transform_indices = @transform_2, window_bounds = array<i64: 128, 128>}, {transform_indices = @transform_3, window_bounds = array<i64: 1, 128>}, {transform_indices = @transform_4, window_bounds = array<i64: 2, 128>}]} {
    %c0_i32 = arith.constant 0 : i32
    %0 = arith.cmpi eq, %arg2, %c0_i32 : i32
    %1 = arith.extui %0 : i1 to i32
    %c0_i32_0 = arith.constant 0 : i32
    %2 = arith.cmpi ne, %1, %c0_i32_0 : i32
    scf.if %2 {
      %cst_10 = arith.constant 0.000000e+00 : f32
      %12 = vector.broadcast %cst_10 : f32 to vector<2x128xf32>
      %c0_11 = arith.constant 0 : index
      %c0_12 = arith.constant 0 : index
      %13 = vector.load %arg8[%c0_11, %c0_12] : memref<2x128xf32, #tpu.memory_space<vmem>>, vector<2x128xf32>
      tpu.vector_store %arg8[%c0_11, %c0_12], %12 {strides = array<i32>} : memref<2x128xf32, #tpu.memory_space<vmem>>, vector<2x128xf32>,
    } else {
    }
    %c0 = arith.constant 0 : index
    %c0_1 = arith.constant 0 : index
    %3 = vector.load %arg8[%c0, %c0_1] : memref<2x128xf32, #tpu.memory_space<vmem>>, vector<2x128xf32>
    %c0_2 = arith.constant 0 : index
    %c0_3 = arith.constant 0 : index
    %4 = vector.load %arg4[%c0_2, %c0_3] : memref<2x128xf32, #tpu.memory_space<vmem>>, vector<2x128xf32>
    %c0_4 = arith.constant 0 : index
    %c0_5 = arith.constant 0 : index
    %5 = vector.load %arg5[%c0_4, %c0_5] : memref<128x128xf32, #tpu.memory_space<vmem>>, vector<128x128xf32>
    %cst = arith.constant dense<0.000000e+00> : vector<2x128xf32>
    %6 = tpu.matmul %4, %5, %cst {dimension_numbers = #tpu.dot_dimension_numbers<[1], [0], [0], [1], [0, 0, 1, 1], [], []>} : vector<2x128xf32>, vector<128x128xf32>, vector<2x128xf32> -> vector<2x128xf32>
    %7 = arith.addf %3, %6 : vector<2x128xf32>
    %c0_6 = arith.constant 0 : index
    %c0_7 = arith.constant 0 : index
    %8 = vector.load %arg8[%c0_6, %c0_7] : memref<2x128xf32, #tpu.memory_space<vmem>>, vector<2x128xf32>
    tpu.vector_store %arg8[%c0_6, %c0_7], %7 {strides = array<i32>} : memref<2x128xf32, #tpu.memory_space<vmem>>, vector<2x128xf32>,
    %c0_i32_8 = arith.constant 0 : i32
    %9 = arith.cmpi eq, %arg2, %c0_i32_8 : i32
    %10 = arith.extui %9 : i1 to i32
    %c0_i32_9 = arith.constant 0 : i32
    %11 = arith.cmpi ne, %10, %c0_i32_9 : i32
    scf.if %11 {
      %c0_10 = arith.constant 0 : index
      %c0_11 = arith.constant 0 : index
      %12 = vector.load %arg8[%c0_10, %c0_11] : memref<2x128xf32, #tpu.memory_space<vmem>>, vector<2x128xf32>
      %c0_12 = arith.constant 0 : index
      %c0_13 = arith.constant 0 : index
      %13 = vector.load %arg6[%c0_12, %c0_13] : memref<1x128xf32, #tpu.memory_space<vmem>>, vector<1x128xf32>
      %14 = vector.broadcast %13 : vector<1x128xf32> to vector<2x128xf32>
      %15 = arith.addf %12, %14 : vector<2x128xf32>
      %c0_14 = arith.constant 0 : index
      %c0_15 = arith.constant 0 : index
      %16 = vector.load %arg3[%c0_14, %c0_15] : memref<2x128xf32, #tpu.memory_space<vmem>>, vector<2x128xf32>
      %17 = arith.addf %15, %16 : vector<2x128xf32>
      %cst_16 = arith.constant 0.000000e+00 : f32
      %18 = vector.broadcast %cst_16 : f32 to vector<2x128xf32>
      %19 = arith.maximumf %17, %18 : vector<2x128xf32>
      %c0_17 = arith.constant 0 : index
      %c0_18 = arith.constant 0 : index
      %20 = vector.load %arg7[%c0_17, %c0_18] : memref<2x128xf32, #tpu.memory_space<vmem>>, vector<2x128xf32>
      tpu.vector_store %arg7[%c0_17, %c0_18], %19 {strides = array<i32>} : memref<2x128xf32, #tpu.memory_space<vmem>>, vector<2x128xf32>,
    } else {
    }
    return
  }
  func.func @transform_0(%arg0: i32, %arg1: i32, %arg2: i32) -> (i32, i32) {
    %c0_i32 = arith.constant 0 : i32
    return %arg0, %arg1 : i32, i32
  }
  func.func @transform_1(%arg0: i32, %arg1: i32, %arg2: i32) -> (i32, i32) {
    %c0_i32 = arith.constant 0 : i32
    return %arg0, %arg2 : i32, i32
  }
  func.func @transform_2(%arg0: i32, %arg1: i32, %arg2: i32) -> (i32, i32) {
    %c0_i32 = arith.constant 0 : i32
    return %arg2, %arg1 : i32, i32
  }
  func.func @transform_3(%arg0: i32, %arg1: i32, %arg2: i32) -> (i32, i32) {
    %c0_i32 = arith.constant 0 : i32
    %c0_i32_0 = arith.constant 0 : i32
    return %c0_i32, %arg1 : i32, i32
  }
  func.func @transform_4(%arg0: i32, %arg1: i32, %arg2: i32) -> (i32, i32) {
    %c0_i32 = arith.constant 0 : i32
    return %arg0, %arg1 : i32, i32
  }
}

</mosaic_0001>

<llo_original>
// kernel: tpu_custom_call.1
$region0: #{tpu_custom_call.1}
  #allocation0 [shape = 'u32[]', space=smem, size = 0x4, offset = 0x4, fixed_abs, tag = 'smem constant byte address 0x4 - core index']
  #allocation1 [shape = 'u32[144,128]{1,0:T(1,128)}', space=vmem, size = 0x12000, scoped, tag = 'internal scratch']
  #allocation2 [shape = 'f32[2,128]{1,0:T(2,128)}', space=vmem, size = 0x400, scoped, tag = 'scratch operand']
  %s0 = inlined_call_operand.hbm [shape: f32[2,128], index: 0, kind: input, shape index: {}]
  %s1 = inlined_call_operand.vmem [shape: f32[2,128], index: 1, kind: input, shape index: {}]
  %s2 = inlined_call_operand.hbm [shape: f32[128,128], index: 2, kind: input, shape index: {}]
  %s3 = inlined_call_operand.vmem [shape: f32[1,128], index: 3, kind: input, shape index: {}]
  %s4 = inlined_call_operand.hbm [shape: f32[2,128], index: 4, kind: output, shape index: {}]
  %s5 = sld [smem:[#allocation0]]
  $region42: #{tpu_custom_call.1} parent=0
    _
  %s7 = ssub.s32 1, %s5
  %s8 = scalar_select 0, %s7, %s5
  $region1: #{tpu_custom_call.1} parent=0
    #allocation3 [shape = 'u8[1024]{0}', space=vmem, size = 0x400, scoped, tag = 'input window, operand 0, single buffered']
    #allocation4 [shape = 's32[1]{0}', space=sflag, size = 0x4, scoped, tag = 'scoped memory for tpu_custom_call.1']
    #allocation5 [shape = 's32[1]{0}', space=sflag, size = 0x4, scoped, tag = 'scoped memory for tpu_custom_call.1']
    #allocation6 [shape = 'u8[65536]{0}', space=vmem, size = 0x10000, scoped, tag = 'input window, operand 2, single buffered']
    #allocation7 [shape = 's32[1]{0}', space=sflag, size = 0x4, scoped, tag = 'scoped memory for tpu_custom_call.1']
    #allocation8 [shape = 'u8[1024]{0}', space=vmem, size = 0x400, scoped, tag = 'output window, operand 0, single buffered']
    %9 = vsyncpa [#allocation4], 0
    %10 = vsyncpa [#allocation7], 0
    %11 = vsyncpa [#allocation5], 0
    // Predicated region
    $region2: #{tpu_custom_call.1} parent=1 // pred_check
      _
    $region3: #{tpu_custom_call.1} parent=1 // pred_check_branch
      %13 = sbr.rel (0) target = $region5
    $region4: #{tpu_custom_call.1} parent=1 // pred_region
      %s15 = ssub.s32 32, 32
      %16 = vsyncadd [#allocation4], %s15
      %s18 = sshll.u32 [#allocation3], 4
      %s19 = int_to_ptr.vmem [resolvable:$true] %s18
      %21 = dma.hbm_to_vmem [thread:$0]  %s0, 32, %s19, [#allocation4]
    $region5: #{tpu_custom_call.1} parent=1 // pred_fallthru
      _
    // Predicated region
    $region6: #{tpu_custom_call.1} parent=1 // pred_check
      _
    $region7: #{tpu_custom_call.1} parent=1 // pred_check_branch
      %23 = sbr.rel (0) target = $region9
    $region8: #{tpu_custom_call.1} parent=1 // pred_region
      _
    $region9: #{tpu_custom_call.1} parent=1 // pred_fallthru
      _
    // Predicated region
    $region10: #{tpu_custom_call.1} parent=1 // pred_check
      _
    $region11: #{tpu_custom_call.1} parent=1 // pred_check_branch
      %25 = sbr.rel (0) target = $region13
    $region12: #{tpu_custom_call.1} parent=1 // pred_region
      %s27 = ssub.s32 2048, 2048
      %28 = vsyncadd [#allocation7], %s27
      %s29 = sshll.u32 [#allocation6], 4
      %s30 = int_to_ptr.vmem [resolvable:$true] %s29
      %35 = dma.hbm_to_vmem [thread:$0]  %s2, 2048, %s30, [#allocation7], 128, 128, 8
    $region13: #{tpu_custom_call.1} parent=1 // pred_fallthru
      _
    // Predicated region
    $region14: #{tpu_custom_call.1} parent=1 // pred_check
      _
    $region15: #{tpu_custom_call.1} parent=1 // pred_check_branch
      %37 = sbr.rel (0) target = $region17
    $region16: #{tpu_custom_call.1} parent=1 // pred_region
      _
    $region17: #{tpu_custom_call.1} parent=1 // pred_fallthru
      _
    // Predicated region
    $region18: #{tpu_custom_call.1} parent=1 // pred_check
      _
    $region19: #{tpu_custom_call.1} parent=1 // pred_check_branch
      %39 = sbr.rel (0) target = $region21
    $region20: #{tpu_custom_call.1} parent=1 // pred_region
      %40 = dma.done [#allocation4], 32
    $region21: #{tpu_custom_call.1} parent=1 // pred_fallthru
      _
    // Predicated region
    $region22: #{tpu_custom_call.1} parent=1 // pred_check
      _
    $region23: #{tpu_custom_call.1} parent=1 // pred_check_branch
      %42 = sbr.rel (0) target = $region25
    $region24: #{tpu_custom_call.1} parent=1 // pred_region
      %43 = dma.done [#allocation7], 2048
    $region25: #{tpu_custom_call.1} parent=1 // pred_fallthru
      _
    %p44 = scmp.eq.s32.totalorder 0, 0
    // Predicated region
    $region26: #{tpu_custom_call.1} parent=1 // pred_check
      %p45 = pneg %p44
    $region27: #{tpu_custom_call.1} parent=1 // pred_check_branch
      %47 = sbr.rel (%p45) target = $region29
    $region28: #{tpu_custom_call.1} parent=1 // pred_region
      %48 = vst [vmem:[#allocation2] sm:$0x3] 0.0
    $region29: #{tpu_custom_call.1} parent=1 // pred_fallthru
      _
    %v49 = vld [vmem:[#allocation2] sm:$0x3]
    %v50 = vld [vmem:[%s1] sm:$0x3]
    %v51 = vld [vmem:[#allocation6] sm:$0xff]
    %v52 = vld [vmem:[#allocation6 + $0x8] sm:$0xff]
    %v53 = vld [vmem:[#allocation6 + $0x10] sm:$0xff]
    %v54 = vld [vmem:[#allocation6 + $0x18] sm:$0xff]
    %v55 = vld [vmem:[#allocation6 + $0x20] sm:$0xff]
    %v56 = vld [vmem:[#allocation6 + $0x28] sm:$0xff]
    %v57 = vld [vmem:[#allocation6 + $0x30] sm:$0xff]
    %v58 = vld [vmem:[#allocation6 + $0x38] sm:$0xff]
    %v59 = vld [vmem:[#allocation6 + $0x40] sm:$0xff]
    %v60 = vld [vmem:[#allocation6 + $0x48] sm:$0xff]
    %v61 = vld [vmem:[#allocation6 + $0x50] sm:$0xff]
    %v62 = vld [vmem:[#allocation6 + $0x58] sm:$0xff]
    %v63 = vld [vmem:[#allocation6 + $0x60] sm:$0xff]
    %v64 = vld [vmem:[#allocation6 + $0x68] sm:$0xff]
    %v65 = vld [vmem:[#allocation6 + $0x70] sm:$0xff]
    %v66 = vld [vmem:[#allocation6 + $0x78] sm:$0xff]
    %67 = vmatprep.subr.mxu0 0.0
    %68 = vmatpush1.msra.mxu0 %v51
    %69 = vmatprep.subr.mxu0 0.0
    %70 = vmatpush1.msra.mxu0 %v52
    %71 = vmatprep.subr.mxu0 0.0
    %72 = vmatpush1.msra.mxu0 %v53
    %73 = vmatprep.subr.mxu0 0.0
    %74 = vmatpush1.msra.mxu0 %v54
    %75 = vmatprep.subr.mxu0 0.0
    %76 = vmatpush1.msra.mxu0 %v55
    %77 = vmatprep.subr.mxu0 0.0
    %78 = vmatpush1.msra.mxu0 %v56
    %79 = vmatprep.subr.mxu0 0.0
    %80 = vmatpush1.msra.mxu0 %v57
    %81 = vmatprep.subr.mxu0 0.0
    %82 = vmatpush1.msra.mxu0 %v58
    %83 = vmatprep.subr.mxu0 0.0
    %84 = vmatpush1.msra.mxu0 %v59
    %85 = vmatprep.subr.mxu0 0.0
    %86 = vmatpush1.msra.mxu0 %v60
    %87 = vmatprep.subr.mxu0 0.0
    %88 = vmatpush1.msra.mxu0 %v61
    %89 = vmatprep.subr.mxu0 0.0
    %90 = vmatpush1.msra.mxu0 %v62
    %91 = vmatprep.subr.mxu0 0.0
    %92 = vmatpush1.msra.mxu0 %v63
    %93 = vmatprep.subr.mxu0 0.0
    %94 = vmatpush1.msra.mxu0 %v64
    %95 = vmatprep.subr.mxu0 0.0
    %96 = vmatpush1.msra.mxu0 %v65
    %97 = vmatprep.subr.mxu0 0.0
    %98 = vmatpush1.msra.mxu0 %v66
    %99 = vmatprep.subr.mxu0 0.0
    %100 = vmatpush1.msra.mxu0 0.0
    %101 = vmatprep.subr.mxu0 0.0
    %102 = vmatpush1.msra.mxu0 0.0
    %103 = vmatprep.subr.mxu0 0.0
    %104 = vmatpush1.msra.mxu0 0.0
    %105 = vmatprep.subr.mxu0 0.0
    %106 = vmatpush1.msra.mxu0 0.0
    %107 = vmatprep.subr.mxu0 0.0
    %108 = vmatpush1.msra.mxu0 0.0
    %109 = vmatprep.subr.mxu0 0.0
    %110 = vmatpush1.msra.mxu0 0.0
    %111 = vmatprep.subr.mxu0 0.0
    %112 = vmatpush1.msra.mxu0 0.0
    %113 = vmatprep.subr.mxu0 0.0
    %114 = vmatpush1.msra.mxu0 0.0
    %115 = vmatprep.subr.mxu0 0.0
    %116 = vmatpush1.msra.mxu0 0.0
    %117 = vmatprep.subr.mxu0 0.0
    %118 = vmatpush1.msra.mxu0 0.0
    %119 = vmatprep.subr.mxu0 0.0
    %120 = vmatpush1.msra.mxu0 0.0
    %121 = vmatprep.subr.mxu0 0.0
    %122 = vmatpush1.msra.mxu0 0.0
    %123 = vmatprep.subr.mxu0 0.0
    %124 = vmatpush1.msra.mxu0 0.0
    %125 = vmatprep.subr.mxu0 0.0
    %126 = vmatpush1.msra.mxu0 0.0
    %127 = vmatprep.subr.mxu0 0.0
    %128 = vmatpush1.msra.mxu0 0.0
    %129 = vmatprep.subr.mxu0 0.0
    %130 = vmatpush1.msra.mxu0 0.0
    %131 = vmatprep.mubr.f32.mxu0 0.0
    %132 = vmatmul.mubr.f32.gmra.mrb[0].mxu0 %v50
    %v133 = vpop.f32.mrb[0].mxu0
    %v134 = vadd.f32 0.0, %v133
    %v135 = vpop.f32.mrb[0].mxu0
    %136 = vdwg.mxu0
    %v137 = vadd.f32 %v49, %v134
    %138 = vst [vmem:[#allocation2] sm:$0x3] %v137
    // Predicated region
    $region30: #{tpu_custom_call.1} parent=1 // pred_check
      %p139 = pneg %p44
    $region31: #{tpu_custom_call.1} parent=1 // pred_check_branch
      %141 = sbr.rel (%p139) target = $region33
    $region32: #{tpu_custom_call.1} parent=1 // pred_region
      %v142 = vld [vmem:[#allocation2] sm:$0x3]
      %v143 = vld [vmem:[%s3] sm:$0x1]
      %v145 = vlaneseq
      %v146 = vshrl.u32 %v145, 7
      %v147 = vsub.s32 0, %v146
      %v148 = vrot.slane %v143, %v147
      %v150 = vadd.f32 %v142, %v148
      %v151 = vld [vmem:[#allocation3] sm:$0x3]
      %v152 = vadd.f32 %v150, %v151
      %v153 = vmax.f32 %v152, 0.0
      %154 = vst [vmem:[#allocation8] sm:$0x3] %v153
    $region33: #{tpu_custom_call.1} parent=1 // pred_fallthru
      _
    // Predicated region
    $region34: #{tpu_custom_call.1} parent=1 // pred_check
      _
    $region35: #{tpu_custom_call.1} parent=1 // pred_check_branch
      %156 = sbr.rel (0) target = $region37
    $region36: #{tpu_custom_call.1} parent=1 // pred_region
      %s158 = ssub.s32 32, 32
      %159 = vsyncadd [#allocation5], %s158
      %s161 = sshll.u32 [#allocation8], 4
      %s162 = int_to_ptr.vmem [resolvable:$true] %s161
      %164 = dma.vmem_to_hbm [thread:$0]  %s162, 32, %s4, [#allocation5]
    $region37: #{tpu_custom_call.1} parent=1 // pred_fallthru
      _
    // Predicated region
    $region38: #{tpu_custom_call.1} parent=1 // pred_check
      _
    $region39: #{tpu_custom_call.1} parent=1 // pred_check_branch
      %166 = sbr.rel (0) target = $region41
    $region40: #{tpu_custom_call.1} parent=1 // pred_region
      %167 = dma.done [#allocation5], 32
    $region41: #{tpu_custom_call.1} parent=1 // pred_fallthru
      _
    %168 = vsyncpa [#allocation4], 1
    %169 = vsyncpa [#allocation7], 1
    %170 = vsyncpa [#allocation5], 1

</llo_original>
